<compile_context>
chip_gen: v6e
topology: v6e:2x2x1
jax: 0.10.0
libtpu: 0.0.40
codegen_flags: <defaults>
</compile_context>

<pallas_src>
import jax
import jax.numpy as jnp
from jax.experimental import pallas as pl
from jax.experimental.pallas import tpu as pltpu

HIDDEN1 = 128
HIDDEN2 = 64
OUT_FEATURES = 2
OUT_PAD = 128          # lane-dense padded width of the final layer


def _round_up(x, m):
    return ((x + m - 1) // m) * m


def mlp_kernel(x_ref, w1_ref, b1_ref, w2_ref, b2_ref, w3_ref, b3_ref, o_ref):
    """One batch tile: (TB, F) -> (TB, OUT_PAD), all three layers fused in VMEM."""
    mm_dtype = w1_ref.dtype                      # bf16 (or f32) MXU inputs
    x = x_ref[...].astype(mm_dtype)              # (TB, F)

    h1 = jnp.dot(x, w1_ref[...], preferred_element_type=jnp.float32) + b1_ref[...]
    h1 = jnp.maximum(h1, 0.0)                    # f32 elementwise (v5e-safe)

    h2 = jnp.dot(h1.astype(mm_dtype), w2_ref[...],
                 preferred_element_type=jnp.float32) + b2_ref[...]
    h2 = jnp.maximum(h2, 0.0)

    out = jnp.dot(h2.astype(mm_dtype), w3_ref[...],
                  preferred_element_type=jnp.float32) + b3_ref[...]
    o_ref[...] = out.astype(o_ref.dtype)         # (TB, OUT_PAD), lane-dense store


def prepare_params(params, matmul_dtype=jnp.bfloat16):
    """One-time prep: transpose PyTorch (out,in) weights to (in,out), pad fc3
    to a lane-dense 128-wide slab, cast matmul operands to `matmul_dtype`."""
    w1 = params["w1"].T.astype(matmul_dtype)                     # (F, 128)
    w2 = params["w2"].T.astype(matmul_dtype)                     # (128, 64)
    w3p = jnp.zeros((HIDDEN2, OUT_PAD), jnp.float32)
    w3p = w3p.at[:, :OUT_FEATURES].set(params["w3"].T).astype(matmul_dtype)
    b1 = params["b1"].reshape(1, -1).astype(jnp.float32)         # (1, 128)
    b2 = params["b2"].reshape(1, -1).astype(jnp.float32)         # (1, 64)
    b3p = jnp.zeros((1, OUT_PAD), jnp.float32)
    b3p = b3p.at[:, :OUT_FEATURES].set(params["b3"])             # (1, 128)
    return {"w1": w1, "b1": b1, "w2": w2, "b2": b2, "w3": w3p, "b3": b3p}


def mlp_forward(x, prep, *, block_b=512):
    """x: (B, input_size) float32.  prep: output of prepare_params."""
    B, F = x.shape

    # Batch tile: multiple of 8 (f32 sublane), capped at block_b.
    tb = min(block_b, _round_up(B, 8))
    Bp = _round_up(B, tb)
    if Bp != B:
        x = jnp.pad(x, ((0, Bp - B), (0, 0)))

    w_bytes = (prep["w1"].size * prep["w1"].dtype.itemsize
               + prep["w2"].size * prep["w2"].dtype.itemsize
               + prep["w3"].size * prep["w3"].dtype.itemsize
               + (prep["b1"].size + prep["b2"].size + prep["b3"].size) * 4)
    flops = 2 * Bp * (F * HIDDEN1 + HIDDEN1 * HIDDEN2 + HIDDEN2 * OUT_PAD)
    bytes_accessed = Bp * F * 4 + Bp * OUT_PAD * 4 + w_bytes

    const = lambda shape: pl.BlockSpec(shape, lambda i: (0, 0))   # VMEM-resident

    out = pl.pallas_call(
        mlp_kernel,
        out_shape=jax.ShapeDtypeStruct((Bp, OUT_PAD), jnp.float32),
        grid=(Bp // tb,),
        in_specs=[
            pl.BlockSpec((tb, F), lambda i: (i, 0)),              # stream x
            const(prep["w1"].shape), const(prep["b1"].shape),
            const(prep["w2"].shape), const(prep["b2"].shape),
            const(prep["w3"].shape), const(prep["b3"].shape),
        ],
        out_specs=pl.BlockSpec((tb, OUT_PAD), lambda i: (i, 0)),  # lane-dense out
        compiler_params=pltpu.CompilerParams(
            dimension_semantics=("parallel",)),                    # v7x 2-TC shard
        cost_estimate=pl.CostEstimate(
            flops=flops, transcendentals=0, bytes_accessed=bytes_accessed),
    )(x, prep["w1"], prep["b1"], prep["w2"], prep["b2"], prep["w3"], prep["b3"])

    return out[:B, :OUT_FEATURES]


def init_params(key, input_size):
    """Deterministic init matching nn.Linear parameter shapes (out, in)."""
    ks = jax.random.split(key, 6)

    def lin(kw, kb, fan_in, fan_out):
        bound = 1.0 / jnp.sqrt(fan_in)
        w = jax.random.uniform(kw, (fan_out, fan_in), jnp.float32, -bound, bound)
        b = jax.random.uniform(kb, (fan_out,), jnp.float32, -bound, bound)
        return w, b

    w1, b1 = lin(ks[0], ks[1], input_size, HIDDEN1)
    w2, b2 = lin(ks[2], ks[3], HIDDEN1, HIDDEN2)
    w3, b3 = lin(ks[4], ks[5], HIDDEN2, OUT_FEATURES)
    return {"w1": w1, "b1": b1, "w2": w2, "b2": b2, "w3": w3, "b3": b3}


def _reference(x, params):
    h1 = jnp.maximum(x @ params["w1"].T + params["b1"], 0.0)
    h2 = jnp.maximum(h1 @ params["w2"].T + params["b2"], 0.0)
    return h2 @ params["w3"].T + params["b3"]


if __name__ == "__main__":
    key = jax.random.PRNGKey(0)
    kx, kp, kx2 = jax.random.split(key, 3)

    batch, input_size = 8, 32
    x = jax.random.normal(kx, (batch, input_size), jnp.float32)
    params = init_params(kp, input_size)

    # f32 matmul path: exact parity with the PyTorch-style reference.
    prep_f32 = prepare_params(params, matmul_dtype=jnp.float32)
    out_f32 = jax.block_until_ready(mlp_forward(x, prep_f32))
    ref = _reference(x, params)
    assert out_f32.shape == (batch, OUT_FEATURES)
    assert jnp.allclose(out_f32, ref, atol=1e-4, rtol=1e-4)

    # bf16-MXU / f32-accumulate path (recommended for v6e/v7x): looser tolerance.
    prep_bf16 = prepare_params(params, matmul_dtype=jnp.bfloat16)
    out_bf16 = jax.block_until_ready(mlp_forward(x, prep_bf16))
    assert jnp.allclose(out_bf16, ref, atol=5e-2, rtol=5e-2)

    # Exercise a multi-step grid with batch padding (batch=200, TB=128 -> grid=(2,)).
    x2 = jax.random.normal(kx2, (200, input_size), jnp.float32)
    out2 = jax.block_until_ready(mlp_forward(x2, prep_bf16, block_b=128))
    ref2 = _reference(x2, params)
    assert out2.shape == (200, OUT_FEATURES)
    assert jnp.allclose(out2, ref2, atol=5e-2, rtol=5e-2)

    print("KERNEL_OK")
</pallas_src>

<mosaic_0001>
module attributes {stable_mosaic.version = 11 : i64} {
  func.func @mlp_kernel(%arg0: i32, %arg1: memref<8x32xf32, #tpu.memory_space<vmem>>, %arg2: memref<32x128xf32, #tpu.memory_space<vmem>>, %arg3: memref<1x128xf32, #tpu.memory_space<vmem>>, %arg4: memref<128x64xf32, #tpu.memory_space<vmem>>, %arg5: memref<1x64xf32, #tpu.memory_space<vmem>>, %arg6: memref<64x128xf32, #tpu.memory_space<vmem>>, %arg7: memref<1x128xf32, #tpu.memory_space<vmem>>, %arg8: memref<8x128xf32, #tpu.memory_space<vmem>>) attributes {dimension_semantics = [#tpu.dimension_semantics<parallel>], iteration_bounds = array<i64: 1>, scalar_prefetch = 0 : i64, scratch_operands = 0 : i64, tpu.core_type = #tpu.core_type<tc>, window_params = [{transform_indices = @transform_0, window_bounds = array<i64: 8, 32>}, {pipeline_mode = #tpu.pipeline_mode<synchronous>, transform_indices = @transform_1, window_bounds = array<i64: 32, 128>}, {pipeline_mode = #tpu.pipeline_mode<synchronous>, transform_indices = @transform_2, window_bounds = array<i64: 1, 128>}, {pipeline_mode = #tpu.pipeline_mode<synchronous>, transform_indices = @transform_3, window_bounds = array<i64: 128, 64>}, {pipeline_mode = #tpu.pipeline_mode<synchronous>, transform_indices = @transform_4, window_bounds = array<i64: 1, 64>}, {pipeline_mode = #tpu.pipeline_mode<synchronous>, transform_indices = @transform_5, window_bounds = array<i64: 64, 128>}, {pipeline_mode = #tpu.pipeline_mode<synchronous>, transform_indices = @transform_6, window_bounds = array<i64: 1, 128>}, {transform_indices = @transform_7, window_bounds = array<i64: 8, 128>}]} {
    %c0 = arith.constant 0 : index
    %c0_0 = arith.constant 0 : index
    %0 = vector.load %arg1[%c0, %c0_0] : memref<8x32xf32, #tpu.memory_space<vmem>>, vector<8x32xf32>
    %c0_1 = arith.constant 0 : index
    %c0_2 = arith.constant 0 : index
    %1 = vector.load %arg2[%c0_1, %c0_2] : memref<32x128xf32, #tpu.memory_space<vmem>>, vector<32x128xf32>
    %cst = arith.constant dense<0.000000e+00> : vector<8x128xf32>
    %2 = tpu.matmul %0, %1, %cst {dimension_numbers = #tpu.dot_dimension_numbers<[1], [0], [0], [1], [0, 0, 1, 1], [], []>} : vector<8x32xf32>, vector<32x128xf32>, vector<8x128xf32> -> vector<8x128xf32>
    %c0_3 = arith.constant 0 : index
    %c0_4 = arith.constant 0 : index
    %3 = vector.load %arg3[%c0_3, %c0_4] : memref<1x128xf32, #tpu.memory_space<vmem>>, vector<1x128xf32>
    %4 = vector.broadcast %3 : vector<1x128xf32> to vector<8x128xf32>
    %5 = arith.addf %2, %4 : vector<8x128xf32>
    %cst_5 = arith.constant 0.000000e+00 : f32
    %6 = vector.broadcast %cst_5 : f32 to vector<8x128xf32>
    %7 = arith.maximumf %5, %6 : vector<8x128xf32>
    %c0_6 = arith.constant 0 : index
    %c0_7 = arith.constant 0 : index
    %8 = vector.load %arg4[%c0_6, %c0_7] : memref<128x64xf32, #tpu.memory_space<vmem>>, vector<128x64xf32>
    %cst_8 = arith.constant dense<0.000000e+00> : vector<8x64xf32>
    %9 = tpu.matmul %7, %8, %cst_8 {dimension_numbers = #tpu.dot_dimension_numbers<[1], [0], [0], [1], [0, 0, 1, 1], [], []>} : vector<8x128xf32>, vector<128x64xf32>, vector<8x64xf32> -> vector<8x64xf32>
    %c0_9 = arith.constant 0 : index
    %c0_10 = arith.constant 0 : index
    %10 = vector.load %arg5[%c0_9, %c0_10] : memref<1x64xf32, #tpu.memory_space<vmem>>, vector<1x64xf32>
    %11 = vector.broadcast %10 : vector<1x64xf32> to vector<8x64xf32>
    %12 = arith.addf %9, %11 : vector<8x64xf32>
    %cst_11 = arith.constant 0.000000e+00 : f32
    %13 = vector.broadcast %cst_11 : f32 to vector<8x64xf32>
    %14 = arith.maximumf %12, %13 : vector<8x64xf32>
    %c0_12 = arith.constant 0 : index
    %c0_13 = arith.constant 0 : index
    %15 = vector.load %arg6[%c0_12, %c0_13] : memref<64x128xf32, #tpu.memory_space<vmem>>, vector<64x128xf32>
    %cst_14 = arith.constant dense<0.000000e+00> : vector<8x128xf32>
    %16 = tpu.matmul %14, %15, %cst_14 {dimension_numbers = #tpu.dot_dimension_numbers<[1], [0], [0], [1], [0, 0, 1, 1], [], []>} : vector<8x64xf32>, vector<64x128xf32>, vector<8x128xf32> -> vector<8x128xf32>
    %c0_15 = arith.constant 0 : index
    %c0_16 = arith.constant 0 : index
    %17 = vector.load %arg7[%c0_15, %c0_16] : memref<1x128xf32, #tpu.memory_space<vmem>>, vector<1x128xf32>
    %18 = vector.broadcast %17 : vector<1x128xf32> to vector<8x128xf32>
    %19 = arith.addf %16, %18 : vector<8x128xf32>
    %c0_17 = arith.constant 0 : index
    %c0_18 = arith.constant 0 : index
    %20 = vector.load %arg8[%c0_17, %c0_18] : memref<8x128xf32, #tpu.memory_space<vmem>>, vector<8x128xf32>
    tpu.vector_store %arg8[%c0_17, %c0_18], %19 {strides = array<i32>} : memref<8x128xf32, #tpu.memory_space<vmem>>, vector<8x128xf32>,
    return
  }
  func.func @transform_0(%arg0: i32) -> (i32, i32) {
    %c0_i32 = arith.constant 0 : i32
    %c0_i32_0 = arith.constant 0 : i32
    return %arg0, %c0_i32 : i32, i32
  }
  func.func @transform_1(%arg0: i32) -> (i32, i32) {
    %c0_i32 = arith.constant 0 : i32
    %c0_i32_0 = arith.constant 0 : i32
    %c0_i32_1 = arith.constant 0 : i32
    return %c0_i32, %c0_i32_0 : i32, i32
  }
  func.func @transform_2(%arg0: i32) -> (i32, i32) {
    %c0_i32 = arith.constant 0 : i32
    %c0_i32_0 = arith.constant 0 : i32
    %c0_i32_1 = arith.constant 0 : i32
    return %c0_i32, %c0_i32_0 : i32, i32
  }
  func.func @transform_3(%arg0: i32) -> (i32, i32) {
    %c0_i32 = arith.constant 0 : i32
    %c0_i32_0 = arith.constant 0 : i32
    %c0_i32_1 = arith.constant 0 : i32
    return %c0_i32, %c0_i32_0 : i32, i32
  }
  func.func @transform_4(%arg0: i32) -> (i32, i32) {
    %c0_i32 = arith.constant 0 : i32
    %c0_i32_0 = arith.constant 0 : i32
    %c0_i32_1 = arith.constant 0 : i32
    return %c0_i32, %c0_i32_0 : i32, i32
  }
  func.func @transform_5(%arg0: i32) -> (i32, i32) {
    %c0_i32 = arith.constant 0 : i32
    %c0_i32_0 = arith.constant 0 : i32
    %c0_i32_1 = arith.constant 0 : i32
    return %c0_i32, %c0_i32_0 : i32, i32
  }
  func.func @transform_6(%arg0: i32) -> (i32, i32) {
    %c0_i32 = arith.constant 0 : i32
    %c0_i32_0 = arith.constant 0 : i32
    %c0_i32_1 = arith.constant 0 : i32
    return %c0_i32, %c0_i32_0 : i32, i32
  }
  func.func @transform_7(%arg0: i32) -> (i32, i32) {
    %c0_i32 = arith.constant 0 : i32
    %c0_i32_0 = arith.constant 0 : i32
    return %arg0, %c0_i32 : i32, i32
  }
}

</mosaic_0001>

<llo_original>
// kernel: tpu_custom_call.1
$region0: #{tpu_custom_call.1}
  #allocation0 [shape = 'u32[]', space=smem, size = 0x4, offset = 0x4, fixed_abs, tag = 'smem constant byte address 0x4 - core index']
  #allocation1 [shape = 'u32[144,128]{1,0:T(1,128)}', space=vmem, size = 0x12000, scoped, tag = 'internal scratch']
  %s0 = inlined_call_operand.vmem [shape: f32[8,32], index: 0, kind: input, shape index: {}]
  %s1 = inlined_call_operand.vmem [shape: f32[32,128], index: 1, kind: input, shape index: {}]
  %s2 = inlined_call_operand.vmem [shape: f32[1,128], index: 2, kind: input, shape index: {}]
  %s3 = inlined_call_operand.vmem [shape: f32[128,64], index: 3, kind: input, shape index: {}]
  %s4 = inlined_call_operand.vmem [shape: f32[1,64], index: 4, kind: input, shape index: {}]
  %s5 = inlined_call_operand.vmem [shape: f32[64,128], index: 5, kind: input, shape index: {}]
  %s6 = inlined_call_operand.vmem [shape: f32[1,128], index: 6, kind: input, shape index: {}]
  %s7 = inlined_call_operand.hbm [shape: f32[8,128], index: 7, kind: output, shape index: {}]
  %s8 = sld [smem:[#allocation0]]
  $region38: #{tpu_custom_call.1} parent=0
    _
  %s10 = ssub.s32 1, %s8
  %s11 = scalar_select 0, %s10, %s8
  $region1: #{tpu_custom_call.1} parent=0
    #allocation2 [shape = 'u8[4096]{0}', space=vmem, size = 0x1000, scoped, tag = 'output window, operand 0, single buffered']
    #allocation3 [shape = 's32[1]{0}', space=sflag, size = 0x4, scoped, tag = 'scoped memory for tpu_custom_call.1']
    %12 = vsyncpa [#allocation3], 0
    // Predicated region
    $region2: #{tpu_custom_call.1} parent=1 // pred_check
      _
    $region3: #{tpu_custom_call.1} parent=1 // pred_check_branch
      %14 = sbr.rel (0) target = $region5
    $region4: #{tpu_custom_call.1} parent=1 // pred_region
      _
    $region5: #{tpu_custom_call.1} parent=1 // pred_fallthru
      _
    // Predicated region
    $region6: #{tpu_custom_call.1} parent=1 // pred_check
      _
    $region7: #{tpu_custom_call.1} parent=1 // pred_check_branch
      %16 = sbr.rel (0) target = $region9
    $region8: #{tpu_custom_call.1} parent=1 // pred_region
      _
    $region9: #{tpu_custom_call.1} parent=1 // pred_fallthru
      _
    // Predicated region
    $region10: #{tpu_custom_call.1} parent=1 // pred_check
      _
    $region11: #{tpu_custom_call.1} parent=1 // pred_check_branch
      %18 = sbr.rel (0) target = $region13
    $region12: #{tpu_custom_call.1} parent=1 // pred_region
      _
    $region13: #{tpu_custom_call.1} parent=1 // pred_fallthru
      _
    // Predicated region
    $region14: #{tpu_custom_call.1} parent=1 // pred_check
      _
    $region15: #{tpu_custom_call.1} parent=1 // pred_check_branch
      %20 = sbr.rel (0) target = $region17
    $region16: #{tpu_custom_call.1} parent=1 // pred_region
      _
    $region17: #{tpu_custom_call.1} parent=1 // pred_fallthru
      _
    // Predicated region
    $region18: #{tpu_custom_call.1} parent=1 // pred_check
      _
    $region19: #{tpu_custom_call.1} parent=1 // pred_check_branch
      %22 = sbr.rel (0) target = $region21
    $region20: #{tpu_custom_call.1} parent=1 // pred_region
      _
    $region21: #{tpu_custom_call.1} parent=1 // pred_fallthru
      _
    // Predicated region
    $region22: #{tpu_custom_call.1} parent=1 // pred_check
      _
    $region23: #{tpu_custom_call.1} parent=1 // pred_check_branch
      %24 = sbr.rel (0) target = $region25
    $region24: #{tpu_custom_call.1} parent=1 // pred_region
      _
    $region25: #{tpu_custom_call.1} parent=1 // pred_fallthru
      _
    // Predicated region
    $region26: #{tpu_custom_call.1} parent=1 // pred_check
      _
    $region27: #{tpu_custom_call.1} parent=1 // pred_check_branch
      %26 = sbr.rel (0) target = $region29
    $region28: #{tpu_custom_call.1} parent=1 // pred_region
      _
    $region29: #{tpu_custom_call.1} parent=1 // pred_fallthru
      _
    %v27 = vld [vmem:[%s0] sm:$0xff]
    %v28 = vld [vmem:[%s1] sm:$0xff]
    %v29 = vld [vmem:[%s1 + $0x8] sm:$0xff]
    %v30 = vld [vmem:[%s1 + $0x10] sm:$0xff]
    %v31 = vld [vmem:[%s1 + $0x18] sm:$0xff]
    %v32 = vld [vmem:[%s2] sm:$0x1]
    %v34 = vlaneseq
    %v35 = vshrl.u32 %v34, 7
    %v36 = vsub.s32 0, %v35
    %v37 = vrot.slane %v32, %v36
    %vm39 = vcmask 261120
    %v41 = vsel %vm39, %v27, 0
    %43 = vmatprep.subr.mxu0 0.0
    %44 = vmatpush1.msra.mxu0 0.0
    %45 = vmatprep.subr.mxu0 0.0
    %46 = vmatpush1.msra.mxu0 0.0
    %47 = vmatprep.subr.mxu0 0.0
    %48 = vmatpush1.msra.mxu0 0.0
    %49 = vmatprep.subr.mxu0 0.0
    %50 = vmatpush1.msra.mxu0 0.0
    %51 = vmatprep.subr.mxu0 0.0
    %52 = vmatpush1.msra.mxu0 0.0
    %53 = vmatprep.subr.mxu0 0.0
    %54 = vmatpush1.msra.mxu0 0.0
    %55 = vmatprep.subr.mxu0 0.0
    %56 = vmatpush1.msra.mxu0 0.0
    %57 = vmatprep.subr.mxu0 0.0
    %58 = vmatpush1.msra.mxu0 0.0
    %59 = vmatprep.subr.mxu0 0.0
    %60 = vmatpush1.msra.mxu0 0.0
    %61 = vmatprep.subr.mxu0 0.0
    %62 = vmatpush1.msra.mxu0 0.0
    %63 = vmatprep.subr.mxu0 0.0
    %64 = vmatpush1.msra.mxu0 0.0
    %65 = vmatprep.subr.mxu0 0.0
    %66 = vmatpush1.msra.mxu0 0.0
    %67 = vmatprep.subr.mxu0 0.0
    %68 = vmatpush1.msra.mxu0 %v31
    %69 = vmatprep.subr.mxu0 0.0
    %70 = vmatpush1.msra.mxu0 %v30
    %71 = vmatprep.subr.mxu0 0.0
    %72 = vmatpush1.msra.mxu0 %v29
    %73 = vmatprep.subr.mxu0 0.0
    %74 = vmatpush1.msra.mxu0 %v28
    %75 = vmatprep.subr.mxu0 0.0
    %76 = vmatpush2.msra.mxu0 0.0
    %77 = vmatprep.subr.mxu0 0.0
    %78 = vmatpush2.msra.mxu0 0.0
    %79 = vmatprep.subr.mxu0 0.0
    %80 = vmatpush2.msra.mxu0 0.0
    %81 = vmatprep.subr.mxu0 0.0
    %82 = vmatpush2.msra.mxu0 0.0
    %83 = vmatprep.subr.mxu0 0.0
    %84 = vmatpush2.msra.mxu0 0.0
    %85 = vmatprep.subr.mxu0 0.0
    %86 = vmatpush2.msra.mxu0 0.0
    %87 = vmatprep.subr.mxu0 0.0
    %88 = vmatpush2.msra.mxu0 0.0
    %89 = vmatprep.subr.mxu0 0.0
    %90 = vmatpush2.msra.mxu0 0.0
    %91 = vmatprep.subr.mxu0 0.0
    %92 = vmatpush2.msra.mxu0 0.0
    %93 = vmatprep.subr.mxu0 0.0
    %94 = vmatpush2.msra.mxu0 0.0
    %95 = vmatprep.subr.mxu0 0.0
    %96 = vmatpush2.msra.mxu0 0.0
    %97 = vmatprep.subr.mxu0 0.0
    %98 = vmatpush2.msra.mxu0 0.0
    %99 = vmatprep.subr.mxu0 0.0
    %100 = vmatpush2.msra.mxu0 0.0
    %101 = vmatprep.subr.mxu0 0.0
    %102 = vmatpush2.msra.mxu0 0.0
    %103 = vmatprep.subr.mxu0 0.0
    %104 = vmatpush2.msra.mxu0 0.0
    %105 = vmatprep.subr.mxu0 0.0
    %106 = vmatpush2.msra.mxu0 0.0
    %107 = vmatprep.mubr.f32.mxu0 0.0
    %108 = vmatmul.mubr.f32.gmra.mxu0 %v41
    %v109 = vpop.f32.mrf.mxu0
    %v110 = vadd.f32 %v37, %v109
    %v111 = vpop.f32.mrf.mxu0
    %112 = vdwg.mxu0
    %v113 = vmax.f32 %v110, 0.0
    %v114 = vld [vmem:[%s3] sm:$0xff]
    %v115 = vld [vmem:[%s3 + $0x8] sm:$0xff]
    %v116 = vld [vmem:[%s3 + $0x10] sm:$0xff]
    %v117 = vld [vmem:[%s3 + $0x18] sm:$0xff]
    %v118 = vld [vmem:[%s3 + $0x20] sm:$0xff]
    %v119 = vld [vmem:[%s3 + $0x28] sm:$0xff]
    %v120 = vld [vmem:[%s3 + $0x30] sm:$0xff]
    %v121 = vld [vmem:[%s3 + $0x38] sm:$0xff]
    %v122 = vld [vmem:[%s3 + $0x40] sm:$0xff]
    %v123 = vld [vmem:[%s3 + $0x48] sm:$0xff]
    %v124 = vld [vmem:[%s3 + $0x50] sm:$0xff]
    %v125 = vld [vmem:[%s3 + $0x58] sm:$0xff]
    %v126 = vld [vmem:[%s3 + $0x60] sm:$0xff]
    %v127 = vld [vmem:[%s3 + $0x68] sm:$0xff]
    %v128 = vld [vmem:[%s3 + $0x70] sm:$0xff]
    %v129 = vld [vmem:[%s3 + $0x78] sm:$0xff]
    %v130 = vld [vmem:[%s4] sm:$0x1]
    %v132 = vlaneseq
    %v133 = vshrl.u32 %v132, 7
    %v134 = vsub.s32 0, %v133
    %v135 = vrot.slane %v130, %v134
    %137 = vmatprep.subr.mxu0 0.0
    %138 = vmatpush1.msra.mxu0 %v129
    %139 = vmatprep.subr.mxu0 0.0
    %140 = vmatpush1.msra.mxu0 %v128
    %141 = vmatprep.subr.mxu0 0.0
    %142 = vmatpush1.msra.mxu0 %v127
    %143 = vmatprep.subr.mxu0 0.0
    %144 = vmatpush1.msra.mxu0 %v126
    %145 = vmatprep.subr.mxu0 0.0
    %146 = vmatpush1.msra.mxu0 %v125
    %147 = vmatprep.subr.mxu0 0.0
    %148 = vmatpush1.msra.mxu0 %v124
    %149 = vmatprep.subr.mxu0 0.0
    %150 = vmatpush1.msra.mxu0 %v123
    %151 = vmatprep.subr.mxu0 0.0
    %152 = vmatpush1.msra.mxu0 %v122
    %153 = vmatprep.subr.mxu0 0.0
    %154 = vmatpush1.msra.mxu0 %v121
    %155 = vmatprep.subr.mxu0 0.0
    %156 = vmatpush1.msra.mxu0 %v120
    %157 = vmatprep.subr.mxu0 0.0
    %158 = vmatpush1.msra.mxu0 %v119
    %159 = vmatprep.subr.mxu0 0.0
    %160 = vmatpush1.msra.mxu0 %v118
    %161 = vmatprep.subr.mxu0 0.0
    %162 = vmatpush1.msra.mxu0 %v117
    %163 = vmatprep.subr.mxu0 0.0
    %164 = vmatpush1.msra.mxu0 %v116
    %165 = vmatprep.subr.mxu0 0.0
    %166 = vmatpush1.msra.mxu0 %v115
    %167 = vmatprep.subr.mxu0 0.0
    %168 = vmatpush1.msra.mxu0 %v114
    %169 = vmatprep.subr.mxu0 0.0
    %170 = vmatpush2.msra.mxu0 0.0
    %171 = vmatprep.subr.mxu0 0.0
    %172 = vmatpush2.msra.mxu0 0.0
    %173 = vmatprep.subr.mxu0 0.0
    %174 = vmatpush2.msra.mxu0 0.0
    %175 = vmatprep.subr.mxu0 0.0
    %176 = vmatpush2.msra.mxu0 0.0
    %177 = vmatprep.subr.mxu0 0.0
    %178 = vmatpush2.msra.mxu0 0.0
    %179 = vmatprep.subr.mxu0 0.0
    %180 = vmatpush2.msra.mxu0 0.0
    %181 = vmatprep.subr.mxu0 0.0
    %182 = vmatpush2.msra.mxu0 0.0
    %183 = vmatprep.subr.mxu0 0.0
    %184 = vmatpush2.msra.mxu0 0.0
    %185 = vmatprep.subr.mxu0 0.0
    %186 = vmatpush2.msra.mxu0 0.0
    %187 = vmatprep.subr.mxu0 0.0
    %188 = vmatpush2.msra.mxu0 0.0
    %189 = vmatprep.subr.mxu0 0.0
    %190 = vmatpush2.msra.mxu0 0.0
    %191 = vmatprep.subr.mxu0 0.0
    %192 = vmatpush2.msra.mxu0 0.0
    %193 = vmatprep.subr.mxu0 0.0
    %194 = vmatpush2.msra.mxu0 0.0
    %195 = vmatprep.subr.mxu0 0.0
    %196 = vmatpush2.msra.mxu0 0.0
    %197 = vmatprep.subr.mxu0 0.0
    %198 = vmatpush2.msra.mxu0 0.0
    %199 = vmatprep.subr.mxu0 0.0
    %200 = vmatpush2.msra.mxu0 0.0
    %201 = vmatprep.mubr.f32.mxu0 0.0
    %202 = vmatmul.mubr.f32.gmra.mxu0 %v113
    %v203 = vpop.f32.mrf.mxu0
    %v204 = vadd.f32 %v135, %v203
    %v205 = vpop.f32.mrf.mxu0
    %206 = vdwg.mxu0
    %v207 = vmax.f32 %v204, 0.0
    %v208 = vld [vmem:[%s5] sm:$0xff]
    %v209 = vld [vmem:[%s5 + $0x8] sm:$0xff]
    %v210 = vld [vmem:[%s5 + $0x10] sm:$0xff]
    %v211 = vld [vmem:[%s5 + $0x18] sm:$0xff]
    %v212 = vld [vmem:[%s5 + $0x20] sm:$0xff]
    %v213 = vld [vmem:[%s5 + $0x28] sm:$0xff]
    %v214 = vld [vmem:[%s5 + $0x30] sm:$0xff]
    %v215 = vld [vmem:[%s5 + $0x38] sm:$0xff]
    %v216 = vld [vmem:[%s6] sm:$0x1]
    %v218 = vlaneseq
    %v219 = vshrl.u32 %v218, 7
    %v220 = vsub.s32 0, %v219
    %v221 = vrot.slane %v216, %v220
    %vm223 = vcmask 523264
    %v225 = vsel %vm223, %v207, 0
    %227 = vmatprep.subr.mxu0 0.0
    %228 = vmatpush1.msra.mxu0 0.0
    %229 = vmatprep.subr.mxu0 0.0
    %230 = vmatpush1.msra.mxu0 0.0
    %231 = vmatprep.subr.mxu0 0.0
    %232 = vmatpush1.msra.mxu0 0.0
    %233 = vmatprep.subr.mxu0 0.0
    %234 = vmatpush1.msra.mxu0 0.0
    %235 = vmatprep.subr.mxu0 0.0
    %236 = vmatpush1.msra.mxu0 0.0
    %237 = vmatprep.subr.mxu0 0.0
    %238 = vmatpush1.msra.mxu0 0.0
    %239 = vmatprep.subr.mxu0 0.0
    %240 = vmatpush1.msra.mxu0 0.0
    %241 = vmatprep.subr.mxu0 0.0
    %242 = vmatpush1.msra.mxu0 0.0
    %243 = vmatprep.subr.mxu0 0.0
    %244 = vmatpush1.msra.mxu0 %v215
    %245 = vmatprep.subr.mxu0 0.0
    %246 = vmatpush1.msra.mxu0 %v214
    %247 = vmatprep.subr.mxu0 0.0
    %248 = vmatpush1.msra.mxu0 %v213
    %249 = vmatprep.subr.mxu0 0.0
    %250 = vmatpush1.msra.mxu0 %v212
    %251 = vmatprep.subr.mxu0 0.0
    %252 = vmatpush1.msra.mxu0 %v211
    %253 = vmatprep.subr.mxu0 0.0
    %254 = vmatpush1.msra.mxu0 %v210
    %255 = vmatprep.subr.mxu0 0.0
    %256 = vmatpush1.msra.mxu0 %v209
    %257 = vmatprep.subr.mxu0 0.0
    %258 = vmatpush1.msra.mxu0 %v208
    %259 = vmatprep.subr.mxu0 0.0
    %260 = vmatpush2.msra.mxu0 0.0
    %261 = vmatprep.subr.mxu0 0.0
    %262 = vmatpush2.msra.mxu0 0.0
    %263 = vmatprep.subr.mxu0 0.0
    %264 = vmatpush2.msra.mxu0 0.0
    %265 = vmatprep.subr.mxu0 0.0
    %266 = vmatpush2.msra.mxu0 0.0
    %267 = vmatprep.subr.mxu0 0.0
    %268 = vmatpush2.msra.mxu0 0.0
    %269 = vmatprep.subr.mxu0 0.0
    %270 = vmatpush2.msra.mxu0 0.0
    %271 = vmatprep.subr.mxu0 0.0
    %272 = vmatpush2.msra.mxu0 0.0
    %273 = vmatprep.subr.mxu0 0.0
    %274 = vmatpush2.msra.mxu0 0.0
    %275 = vmatprep.subr.mxu0 0.0
    %276 = vmatpush2.msra.mxu0 0.0
    %277 = vmatprep.subr.mxu0 0.0
    %278 = vmatpush2.msra.mxu0 0.0
    %279 = vmatprep.subr.mxu0 0.0
    %280 = vmatpush2.msra.mxu0 0.0
    %281 = vmatprep.subr.mxu0 0.0
    %282 = vmatpush2.msra.mxu0 0.0
    %283 = vmatprep.subr.mxu0 0.0
    %284 = vmatpush2.msra.mxu0 0.0
    %285 = vmatprep.subr.mxu0 0.0
    %286 = vmatpush2.msra.mxu0 0.0
    %287 = vmatprep.subr.mxu0 0.0
    %288 = vmatpush2.msra.mxu0 0.0
    %289 = vmatprep.subr.mxu0 0.0
    %290 = vmatpush2.msra.mxu0 0.0
    %291 = vmatprep.mubr.f32.mxu0 0.0
    %292 = vmatmul.mubr.f32.gmra.mxu0 %v225
    %v293 = vpop.f32.mrf.mxu0
    %v294 = vadd.f32 %v221, %v293
    %v295 = vpop.f32.mrf.mxu0
    %296 = vdwg.mxu0
    %297 = vst [vmem:[#allocation2] sm:$0xff] %v294
    // Predicated region
    $region30: #{tpu_custom_call.1} parent=1 // pred_check
      _
    $region31: #{tpu_custom_call.1} parent=1 // pred_check_branch
      %299 = sbr.rel (0) target = $region33
    $region32: #{tpu_custom_call.1} parent=1 // pred_region
      %s301 = ssub.s32 128, 128
      %302 = vsyncadd [#allocation3], %s301
      %s304 = sshll.u32 [#allocation2], 4
      %s305 = int_to_ptr.vmem [resolvable:$true] %s304
      %307 = dma.vmem_to_hbm [thread:$0]  %s305, 128, %s7, [#allocation3]
    $region33: #{tpu_custom_call.1} parent=1 // pred_fallthru
      _
    // Predicated region
    $region34: #{tpu_custom_call.1} parent=1 // pred_check
      _
    $region35: #{tpu_custom_call.1} parent=1 // pred_check_branch
      %309 = sbr.rel (0) target = $region37
    $region36: #{tpu_custom_call.1} parent=1 // pred_region
      %310 = dma.done [#allocation3], 128
    $region37: #{tpu_custom_call.1} parent=1 // pred_fallthru
      _
    %311 = vsyncpa [#allocation3], 1

</llo_original>
